<compile_context>
chip_gen: v7x
topology: tpu7x:2x2x1
jax: 0.10.0
libtpu: 0.0.40
codegen_flags: <defaults>
</compile_context>

<pallas_src>
from functools import partial

import jax
import jax.numpy as jnp
from jax.experimental import pallas as pl
from jax.experimental.pallas import tpu as pltpu

_BATCH_PAD = 8    # sublane-native padding for the batch dim
_K_PAD = 8        # real K is 4; 8 keeps the sublane dim native, tiny DMA
_N_PAD = 128      # lane-dense output tile -> unmasked vst
_NUM_CHOICES = 3


def _dict_mm_kernel(choice_ref, x_ref, w_ref, o_ref):
    # choice_ref (SMEM scalar prefetch) is consumed only by the weight
    # index_map; the body is a single MXU matmul on VMEM-resident tiles:
    # (8, 8) @ (8, 128) -> (8, 128).
    del choice_ref
    o_ref[...] = jnp.dot(
        x_ref[...], w_ref[...], preferred_element_type=jnp.float32
    ).astype(o_ref.dtype)


def _padded_mm(choice_idx, x_pad, w_all):
    """choice_idx: int32[1]; x_pad: f32[8,8]; w_all: f32[3,8,128] -> f32[8,128]."""
    return pl.pallas_call(
        _dict_mm_kernel,
        out_shape=jax.ShapeDtypeStruct((_BATCH_PAD, _N_PAD), x_pad.dtype),
        grid_spec=pltpu.PrefetchScalarGridSpec(
            num_scalar_prefetch=1,
            grid=(1,),
            in_specs=[
                # Full-array (8, 8) block: exempt from the 128-lane rule.
                pl.BlockSpec((_BATCH_PAD, _K_PAD), lambda i, c: (0, 0)),
                # Leading None squeezes the choice axis: kernel sees (8, 128);
                # the slab index comes from the prefetched scalar (no retrace
                # per choice).
                pl.BlockSpec((None, _K_PAD, _N_PAD), lambda i, c: (c[0], 0, 0)),
            ],
            out_specs=pl.BlockSpec((_BATCH_PAD, _N_PAD), lambda i, c: (0, 0)),
        ),
        compiler_params=pltpu.CompilerParams(
            dimension_semantics=("arbitrary",),
        ),
    )(choice_idx, x_pad, w_all)


@partial(jax.jit, static_argnums=(3,))
def _dict_dense_forward(x, choice_idx, w_all, n_out):
    """Whole per-call device path in one dispatch: pad -> kernel -> slice."""
    batch, k = x.shape  # static under jit
    # Clamp the choice index so a bad value can never drive the weight DMA
    # out of bounds.
    choice_idx = jnp.clip(choice_idx, 0, _NUM_CHOICES - 1).astype(jnp.int32)
    # Zero-pad x to (8, 8); zero K columns contribute exactly 0 to the matmul.
    x_pad = jnp.zeros((_BATCH_PAD, _K_PAD), dtype=jnp.float32)
    x_pad = x_pad.at[:batch, :k].set(x.astype(jnp.float32))
    out_pad = _padded_mm(choice_idx, x_pad, w_all)
    return out_pad[:batch, :n_out]


class MyDictDense:
    """JAX mirror of the PyTorch ParameterDict module."""

    _NAMES = ("linear1", "linear2", "linear3")

    def __init__(self, key):
        k1, k2, k3 = jax.random.split(key, 3)
        # torch.randn(...) equivalents, deterministic via PRNGKey.
        self.params = {
            "linear1": jax.random.normal(k1, (4, 4), dtype=jnp.float32),
            "linear2": jax.random.normal(k2, (4, 1), dtype=jnp.float32),
            "linear3": jax.random.normal(k3, (4, 2), dtype=jnp.float32),
        }
        self._out_features = {n: self.params[n].shape[1] for n in self._NAMES}

        # Pack all weights into one static-shape, zero-padded slab so every
        # choice hits the same compiled kernel (weight picked via scalar
        # prefetch feeding the index_map).
        w_all = jnp.zeros((_NUM_CHOICES, _K_PAD, _N_PAD), dtype=jnp.float32)
        for i, name in enumerate(self._NAMES):
            w = self.params[name]
            w_all = w_all.at[i, : w.shape[0], : w.shape[1]].set(w)
        self._w_all = jax.device_put(w_all)

        # Pre-staged int32[1] device buffers: no per-call host->device copy.
        self._choice_idx = {
            name: jax.device_put(jnp.array([i], dtype=jnp.int32))
            for i, name in enumerate(self._NAMES)
        }

    def forward(self, x, choice="linear1"):
        batch, k = x.shape
        assert batch <= _BATCH_PAD and k <= _K_PAD, "module is sized for tiny inputs"
        # TODO(synk): if this ever runs with batch >> 8, add a "parallel" batch
        # grid axis (BlockSpec((TILE_B, K), lambda i: (i, 0))) and size TILE_B
        # against v7x's 32 MiB scoped-VMEM default (64 MiB physical).
        return _dict_dense_forward(
            x, self._choice_idx[choice], self._w_all, self._out_features[choice]
        )


if __name__ == "__main__":
    key = jax.random.PRNGKey(0)
    module = MyDictDense(key)

    # Input consistent with the PyTorch spec: x = torch.ones(1, 4).
    x = jnp.ones((1, 4), dtype=jnp.float32)

    for choice in ("linear1", "linear2", "linear3"):
        out = module.forward(x, choice=choice)
        jax.block_until_ready(out)
        # Reference check against plain JAX matmul.
        ref = x @ module.params[choice]
        assert out.shape == ref.shape, (choice, out.shape, ref.shape)
        assert jnp.allclose(out, ref, atol=1e-5, rtol=1e-5), (choice, out, ref)

    print("KERNEL_OK")
</pallas_src>

<mosaic_0001>
module attributes {stable_mosaic.version = 11 : i64} {
  func.func @_dict_mm_kernel(%arg0: i32, %arg1: memref<1xi32, #tpu.memory_space<smem>>, %arg2: memref<8x8xf32, #tpu.memory_space<vmem>>, %arg3: memref<1x8x128xf32, #tpu.memory_space<vmem>>, %arg4: memref<8x128xf32, #tpu.memory_space<vmem>>) attributes {dimension_semantics = [#tpu.dimension_semantics<arbitrary>], iteration_bounds = array<i64: 1>, scalar_prefetch = 1 : i64, scratch_operands = 0 : i64, tpu.core_type = #tpu.core_type<tc>, window_params = [{pipeline_mode = #tpu.pipeline_mode<synchronous>, transform_indices = @transform_0, window_bounds = array<i64: 8, 8>}, {transform_indices = @transform_1, window_bounds = array<i64: 1, 8, 128>}, {pipeline_mode = #tpu.pipeline_mode<synchronous>, transform_indices = @transform_2, window_bounds = array<i64: 8, 128>}]} {
    %c0 = arith.constant 0 : index
    %c0_0 = arith.constant 0 : index
    %0 = vector.load %arg2[%c0, %c0_0] : memref<8x8xf32, #tpu.memory_space<vmem>>, vector<8x8xf32>
    %c0_1 = arith.constant 0 : index
    %c0_2 = arith.constant 0 : index
    %c0_3 = arith.constant 0 : index
    %1 = vector.load %arg3[%c0_1, %c0_2, %c0_3] : memref<1x8x128xf32, #tpu.memory_space<vmem>>, vector<1x8x128xf32>
    %2 = vector.shape_cast %1 : vector<1x8x128xf32> to vector<8x128xf32>
    %cst = arith.constant dense<0.000000e+00> : vector<8x128xf32>
    %3 = tpu.matmul %0, %2, %cst {dimension_numbers = #tpu.dot_dimension_numbers<[1], [0], [0], [1], [0, 0, 1, 1], [], []>} : vector<8x8xf32>, vector<8x128xf32>, vector<8x128xf32> -> vector<8x128xf32>
    %c0_4 = arith.constant 0 : index
    %c0_5 = arith.constant 0 : index
    %4 = vector.load %arg4[%c0_4, %c0_5] : memref<8x128xf32, #tpu.memory_space<vmem>>, vector<8x128xf32>
    tpu.vector_store %arg4[%c0_4, %c0_5], %3 {strides = array<i32>} : memref<8x128xf32, #tpu.memory_space<vmem>>, vector<8x128xf32>,
    return
  }
  func.func @transform_0(%arg0: i32, %arg1: memref<1xi32, #tpu.memory_space<smem>>) -> (i32, i32) {
    %c0_i32 = arith.constant 0 : i32
    %c0_i32_0 = arith.constant 0 : i32
    %c0_i32_1 = arith.constant 0 : i32
    return %c0_i32, %c0_i32_0 : i32, i32
  }
  func.func @transform_1(%arg0: i32, %arg1: memref<1xi32, #tpu.memory_space<smem>>) -> (i32, i32, i32) {
    %c0 = arith.constant 0 : index
    %0 = memref.load %arg1[%c0] : memref<1xi32, #tpu.memory_space<smem>>
    %c0_i32 = arith.constant 0 : i32
    %c0_i32_0 = arith.constant 0 : i32
    %c0_i32_1 = arith.constant 0 : i32
    return %0, %c0_i32, %c0_i32_0 : i32, i32, i32
  }
  func.func @transform_2(%arg0: i32, %arg1: memref<1xi32, #tpu.memory_space<smem>>) -> (i32, i32) {
    %c0_i32 = arith.constant 0 : i32
    %c0_i32_0 = arith.constant 0 : i32
    %c0_i32_1 = arith.constant 0 : i32
    return %c0_i32, %c0_i32_0 : i32, i32
  }
}

</mosaic_0001>

<llo_original>
// kernel: _dict_dense_forward.1
$region0: #{_dict_dense_forward.1}
  #allocation0 [shape = 'u32[]', space=smem, size = 0x4, offset = 0x4, fixed_abs, tag = 'smem constant byte address 0x4 - core index']
  #allocation1 [shape = 'u32[144,128]{1,0:T(1,128)}', space=vmem, size = 0x12000, scoped, tag = 'internal scratch']
  #allocation2 [shape = 's32[1]{0}', space=sflag, size = 0x4, scoped, tag = 'scoped memory for _dict_dense_forward.1']
  #allocation3 [shape = 's32[1]{0:T(128)S(6)}', space=smem, size = 0x200, scoped, tag = 'prefetched SMEM operand 0']
  %s0 = inlined_call_operand.<no memory space> [shape: s32[1], index: 0, kind: input, shape index: {}]
  %s1 = inlined_call_operand.vmem [shape: f32[8,8], index: 1, kind: input, shape index: {}]
  %s2 = inlined_call_operand.vmem [shape: f32[3,8,128], index: 2, kind: input, shape index: {}]
  %s3 = inlined_call_operand.vmem [shape: f32[8,128], index: 3, kind: output, shape index: {}]
  %s4 = sld [smem:[#allocation0]]
  $region18: #{_dict_dense_forward.1} parent=0
    _
  %s6 = ssub.s32 1, %s4
  %s7 = scalar_select 0, %s6, %s4
  %8 = sst [smem:[#allocation3]] %s0
  // Predicated region
  $region2: #{_dict_dense_forward.1} parent=0 // pred_check
    _
  $region3: #{_dict_dense_forward.1} parent=0 // pred_check_branch
    %10 = sbr.rel (0) target = $region5
  $region4: #{_dict_dense_forward.1} parent=0 // pred_region
    _
  $region5: #{_dict_dense_forward.1} parent=0 // pred_fallthru
    _
  // Predicated region
  $region6: #{_dict_dense_forward.1} parent=0 // pred_check
    _
  $region7: #{_dict_dense_forward.1} parent=0 // pred_check_branch
    %12 = sbr.rel (0) target = $region9
  $region8: #{_dict_dense_forward.1} parent=0 // pred_region
    %s13 = sld [smem:[#allocation3]]
    %p14 = scmp.lt.s32.totalorder %s13, 2
    %s15 = scalar_select %p14, %s13, 2
    %s16 = smul.addr %s15, 8
    %s17 = scalar_lea.vmem %s2, %s16
    %s18 = sld [smem:[#allocation3]]
  $region9: #{_dict_dense_forward.1} parent=0 // pred_fallthru
    _
  %s19 = sld [smem:[#allocation3]]
  %p20 = scmp.lt.s32.totalorder %s19, 2
  %s21 = scalar_select %p20, %s19, 2
  %s22 = smul.addr %s21, 8
  %s23 = scalar_lea.vmem %s2, %s22
  %s24 = sld [smem:[#allocation3]]
  %p25 = scmp.lt.s32.totalorder %s24, 2
  %s26 = scalar_select %p25, %s24, 2
  %s27 = smul.addr %s26, 8
  %s28 = scalar_lea.vmem %s2, %s27
  %s29 = sld [smem:[#allocation3]]
  %v30 = vld [vmem:[%s1] sm:$0xff]
  %v31 = vld [vmem:[%s28] sm:$0xff]
  %vm32 = vcmask 64512
  %v34 = vsel %vm32, %v30, 0
  %36 = vmatprep.subr.mxu0 0.0
  %37 = vmatpush1.msra.mxu0 %v31
  %38 = vmatprep.subr.mxu0 0.0
  %39 = vmatpush1.msra.mxu0 0.0
  %40 = vmatprep.subr.mxu0 0.0
  %41 = vmatpush1.msra.mxu0 0.0
  %42 = vmatprep.subr.mxu0 0.0
  %43 = vmatpush1.msra.mxu0 0.0
  %44 = vmatprep.subr.mxu0 0.0
  %45 = vmatpush1.msra.mxu0 0.0
  %46 = vmatprep.subr.mxu0 0.0
  %47 = vmatpush1.msra.mxu0 0.0
  %48 = vmatprep.subr.mxu0 0.0
  %49 = vmatpush1.msra.mxu0 0.0
  %50 = vmatprep.subr.mxu0 0.0
  %51 = vmatpush1.msra.mxu0 0.0
  %52 = vmatprep.subr.mxu0 0.0
  %53 = vmatpush1.msra.mxu0 0.0
  %54 = vmatprep.subr.mxu0 0.0
  %55 = vmatpush1.msra.mxu0 0.0
  %56 = vmatprep.subr.mxu0 0.0
  %57 = vmatpush1.msra.mxu0 0.0
  %58 = vmatprep.subr.mxu0 0.0
  %59 = vmatpush1.msra.mxu0 0.0
  %60 = vmatprep.subr.mxu0 0.0
  %61 = vmatpush1.msra.mxu0 0.0
  %62 = vmatprep.subr.mxu0 0.0
  %63 = vmatpush1.msra.mxu0 0.0
  %64 = vmatprep.subr.mxu0 0.0
  %65 = vmatpush1.msra.mxu0 0.0
  %66 = vmatprep.subr.mxu0 0.0
  %67 = vmatpush1.msra.mxu0 0.0
  %68 = vmatprep.subr.mxu0 0.0
  %69 = vmatpush1.msra.mxu0 0.0
  %70 = vmatprep.subr.mxu0 0.0
  %71 = vmatpush1.msra.mxu0 0.0
  %72 = vmatprep.subr.mxu0 0.0
  %73 = vmatpush1.msra.mxu0 0.0
  %74 = vmatprep.subr.mxu0 0.0
  %75 = vmatpush1.msra.mxu0 0.0
  %76 = vmatprep.subr.mxu0 0.0
  %77 = vmatpush1.msra.mxu0 0.0
  %78 = vmatprep.subr.mxu0 0.0
  %79 = vmatpush1.msra.mxu0 0.0
  %80 = vmatprep.subr.mxu0 0.0
  %81 = vmatpush1.msra.mxu0 0.0
  %82 = vmatprep.subr.mxu0 0.0
  %83 = vmatpush1.msra.mxu0 0.0
  %84 = vmatprep.subr.mxu0 0.0
  %85 = vmatpush1.msra.mxu0 0.0
  %86 = vmatprep.subr.mxu0 0.0
  %87 = vmatpush1.msra.mxu0 0.0
  %88 = vmatprep.subr.mxu0 0.0
  %89 = vmatpush1.msra.mxu0 0.0
  %90 = vmatprep.subr.mxu0 0.0
  %91 = vmatpush1.msra.mxu0 0.0
  %92 = vmatprep.subr.mxu0 0.0
  %93 = vmatpush1.msra.mxu0 0.0
  %94 = vmatprep.subr.mxu0 0.0
  %95 = vmatpush1.msra.mxu0 0.0
  %96 = vmatprep.subr.mxu0 0.0
  %97 = vmatpush1.msra.mxu0 0.0
  %98 = vmatprep.subr.mxu0 0.0
  %99 = vmatpush1.msra.mxu0 0.0
  %100 = vmatprep.mubr.f32.mxu0 0.0
  %101 = vmatmul.mubr.f32.gmra.mrb[0].mxu0 %v34
  %v102 = vpop.f32.mrb[0].mxu0
  %v103 = vadd.f32 0.0, %v102
  %v104 = vpop.f32.mrb[0].mxu0
  %105 = vdwg.mxu0
  %106 = vst [vmem:[%s3] sm:$0xff] %v103
  // Predicated region
  $region10: #{_dict_dense_forward.1} parent=0 // pred_check
    _
  $region11: #{_dict_dense_forward.1} parent=0 // pred_check_branch
    %108 = sbr.rel (0) target = $region13
  $region12: #{_dict_dense_forward.1} parent=0 // pred_region
    _
  $region13: #{_dict_dense_forward.1} parent=0 // pred_fallthru
    _
  // Predicated region
  $region14: #{_dict_dense_forward.1} parent=0 // pred_check
    _
  $region15: #{_dict_dense_forward.1} parent=0 // pred_check_branch
    %110 = sbr.rel (0) target = $region17
  $region16: #{_dict_dense_forward.1} parent=0 // pred_region
    _
  $region17: #{_dict_dense_forward.1} parent=0 // pred_fallthru
    _

</llo_original>
